<compile_context>
chip_gen: v5e
topology: v5e:2x2
jax: 0.10.0
libtpu: 0.0.40
codegen_flags: <defaults>
</compile_context>

<pallas_src>
import jax
import jax.numpy as jnp
from jax.experimental import pallas as pl
from jax.experimental.pallas import tpu as pltpu


def _round_up(x, m):
    return (x + m - 1) // m * m


# ----------------------------------------------------------------------------
# Kernel: one row-panel of nodes per grid step, processed in row chunks.
# ----------------------------------------------------------------------------
def _make_kernel(chunk_rows, n_chunks):
    def kernel(a_ref, x_ref, gz_ref, bz_ref, gh_ref, bh_ref,
               s_ref, wl_ref, bl_ref, out_ref):
        # Small folded gate rows (1, P*H padded) -- hoisted, broadcast over rows.
        gz = gz_ref[...]
        bz = bz_ref[...]
        gh = gh_ref[...]
        bh = bh_ref[...]
        bl = bl_ref[...]

        def chunk(c, carry):
            r = pl.multiple_of(c * chunk_rows, chunk_rows)
            # One MXU matmul per chunk emits period-packed activations:
            # ax[m, p*H + j] == (A_hat @ x_p)[m]   (bf16 operands, f32 accumulate)
            ax = jnp.dot(a_ref[pl.ds(r, chunk_rows), :], x_ref[...],
                         preferred_element_type=jnp.float32)
            # GRU gates with h0 == 0 (r-gate dead, z*h0 == 0): lane-dense f32.
            z = jax.nn.sigmoid(ax * gz + bz)          # update gate, all periods
            h_tilde = jnp.tanh(ax * gh + bh)          # candidate,   all periods
            contrib = (1.0 - z) * h_tilde             # (chunk, P*H padded)
            # probs-weighted period-group sum folded into an MXU matmul:
            # acc[m, j] = sum_p probs[p] * contrib[m, p*H + j]
            acc = jnp.dot(contrib, s_ref[...], preferred_element_type=jnp.float32)
            h_relu = jnp.maximum(acc, 0.0)            # F.relu
            # Final Linear(H -> 1), lane-dense padded to 128 output lanes.
            out_ref[pl.ds(r, chunk_rows), :] = (
                jnp.dot(h_relu, wl_ref[...], preferred_element_type=jnp.float32)
                + bl)
            return carry

        jax.lax.fori_loop(0, n_chunks, chunk, 0, unroll=True)

    return kernel


# ----------------------------------------------------------------------------
# Plain-JAX glue
# ----------------------------------------------------------------------------
def build_a_hat(edge_index, edge_weight, num_nodes):
    """Dense GCN-normalized adjacency: D^-1/2 (A + I) D^-1/2 (self-loops added)."""
    row = edge_index[0]                       # source
    col = edge_index[1]                       # target
    loop = jnp.arange(num_nodes, dtype=edge_index.dtype)
    row = jnp.concatenate([row, loop])
    col = jnp.concatenate([col, loop])
    w = jnp.concatenate([edge_weight, jnp.ones((num_nodes,), edge_weight.dtype)])
    deg = jnp.zeros((num_nodes,), edge_weight.dtype).at[col].add(w)
    dinv = jnp.where(deg > 0, jax.lax.rsqrt(deg), 0.0)
    norm = dinv[row] * w * dinv[col]
    a = jnp.zeros((num_nodes, num_nodes), edge_weight.dtype)
    a = a.at[col, row].add(norm)              # out[target] += norm * x[source]
    return a


def init_params(key, node_features, hidden, periods):
    # x.view(N, 1, F) feeds exactly one feature per period into the TGCN cell.
    assert node_features == 1
    ks = jax.random.split(key, 7)
    scale = 1.0 / jnp.sqrt(2.0 * hidden)
    return {
        "attention": jax.random.uniform(ks[0], (1, periods), jnp.float32),
        "conv_w": jax.random.normal(ks[1], (3, node_features, hidden), jnp.float32) * 0.5,
        "conv_b": jnp.zeros((3, 1, hidden), jnp.float32),
        "u1": jax.random.normal(ks[2], (3, hidden, hidden), jnp.float32) * scale,
        "u2": jax.random.normal(ks[3], (3, hidden, hidden), jnp.float32) * scale,
        "lb": jax.random.normal(ks[4], (3, 1, hidden), jnp.float32) * 0.1,
        "w_lin": jax.random.normal(ks[5], (hidden, 1), jnp.float32) / jnp.sqrt(hidden),
        "b_lin": jax.random.normal(ks[6], (1, 1), jnp.float32) * 0.1,
    }


def my_a3tgcn_forward(params, x, edge_index, edge_weight, h=None, c=None,
                      mxu_dtype=jnp.bfloat16):
    # mirrors MY_A3TGCN_.forward: h and c are ignored; TGCN hidden starts at 0.
    num_nodes = x.shape[0]
    periods = params["attention"].shape[1]
    hidden = params["u1"].shape[1]

    x_view = x.reshape(num_nodes, 1, x.shape[1])[:, 0, :periods]        # (N, P)
    a_hat = build_a_hat(edge_index, edge_weight, num_nodes)             # (N, N)

    # --- host-side folding of the rank-1 / zero-h0 structure (exact) --------
    probs = jax.nn.softmax(params["attention"][0]).astype(jnp.float32)  # (P,)
    gz = params["conv_w"][0] @ params["u1"][0]                          # (1, H)
    bz = params["conv_b"][0] @ params["u1"][0] + params["lb"][0]        # (1, H)
    gh = params["conv_w"][2] @ params["u1"][2]                          # (1, H)
    bh = params["conv_b"][2] @ params["u1"][2] + params["lb"][2]        # (1, H)

    # --- period-packed lane layout + lane-dense padding ----------------------
    ph = periods * hidden
    ph_pad = _round_up(ph, 128)          # packed activation lanes
    hp = _round_up(hidden, 128)          # hidden lanes after period sum
    outp = 128                           # lane-dense output panel
    k_pad = _round_up(num_nodes, 128)    # MXU K dim / A columns / X rows

    def tile_row(v):                     # (1,H) -> period-tiled, zero-padded (1, ph_pad)
        return jnp.pad(jnp.tile(v, (1, periods)), ((0, 0), (0, ph_pad - ph)))

    gz_t, bz_t, gh_t, bh_t = map(tile_row, (gz, bz, gh, bh))

    # probs-weighted period-group-sum matrix: S[p*H + j, j] = probs[p]
    eye = jnp.eye(hidden, dtype=jnp.float32)
    s = (probs[:, None, None] * eye[None]).reshape(ph, hidden)
    s = jnp.pad(s, ((0, ph_pad - ph), (0, hp - hidden)))                # (ph_pad, hp)

    wl = jnp.pad(params["w_lin"], ((0, hp - hidden), (0, outp - 1)))    # (hp, outp)
    bl = jnp.pad(params["b_lin"], ((0, 0), (0, outp - 1)))              # (1, outp)

    # spread X so one matmul emits period-packed activations: X_s[:, p*H+j] = X[:, p]
    x_spread = jnp.repeat(x_view, hidden, axis=1)                       # (N, P*H)
    x_spread = jnp.pad(x_spread, ((0, k_pad - num_nodes), (0, ph_pad - ph)))
    x_spread = x_spread.astype(mxu_dtype)

    # --- per-generation row-tile sizing --------------------------------------
    mxu_bytes = jnp.dtype(mxu_dtype).itemsize
    try:
        vmem_cap = int(pltpu.get_tpu_info().vmem_capacity_bytes)
    except Exception:
        vmem_cap = 64 * 1024 * 1024          # conservative: v7x per-TC VMEM
    vmem_limit = int(min(0.85 * vmem_cap, 112 * 1024 * 1024))
    x_resident = 2 * k_pad * ph_pad * mxu_bytes          # (possibly double-buffered)
    budget_a = max(2 * 8 * k_pad * mxu_bytes,
                   vmem_limit - x_resident - 4 * 1024 * 1024)
    tm = budget_a // (2 * k_pad * mxu_bytes)             # double-buffered A panel
    tm = max(8, min(512, (tm // 8) * 8))
    if tm >= num_nodes and num_nodes > 8:
        # guarantee >= 2 row tiles so both v7x TensorCores get work
        tm = _round_up((num_nodes + 1) // 2, 8)
    if tm >= 64:
        tm = (tm // 64) * 64
        chunk_rows = 64                                   # bounds vreg live ranges
    else:
        chunk_rows = tm
    n_chunks = tm // chunk_rows
    n_row_pad = _round_up(num_nodes, tm)

    a_pad = jnp.pad(a_hat, ((0, n_row_pad - num_nodes), (0, k_pad - num_nodes)))
    a_pad = a_pad.astype(mxu_dtype)

    grid = (n_row_pad // tm,)
    kernel = _make_kernel(chunk_rows, n_chunks)

    out_pad = pl.pallas_call(
        kernel,
        out_shape=jax.ShapeDtypeStruct((n_row_pad, outp), jnp.float32),
        grid=grid,
        in_specs=[
            pl.BlockSpec((tm, k_pad), lambda i: (i, 0)),            # A row panel (bf16)
            pl.BlockSpec((k_pad, ph_pad), lambda i: (0, 0)),        # X spread, resident
            pl.BlockSpec((1, ph_pad), lambda i: (0, 0)),            # gz (tiled)
            pl.BlockSpec((1, ph_pad), lambda i: (0, 0)),            # bz (tiled)
            pl.BlockSpec((1, ph_pad), lambda i: (0, 0)),            # gh (tiled)
            pl.BlockSpec((1, ph_pad), lambda i: (0, 0)),            # bh (tiled)
            pl.BlockSpec((ph_pad, hp), lambda i: (0, 0)),           # S (probs-weighted)
            pl.BlockSpec((hp, outp), lambda i: (0, 0)),             # W_lin (padded)
            pl.BlockSpec((1, outp), lambda i: (0, 0)),              # b_lin (padded)
        ],
        out_specs=pl.BlockSpec((tm, outp), lambda i: (i, 0)),
        compiler_params=pltpu.CompilerParams(
            dimension_semantics=("parallel",),
            vmem_limit_bytes=vmem_limit,
        ),
    )(a_pad, x_spread, gz_t, bz_t, gh_t, bh_t, s, wl, bl)

    # TODO(synk): dense A_hat is O(N^2); a sparse/gather SpMM path would be
    # needed for very large graphs (scalability only, not a numerics issue).
    return out_pad[:num_nodes, :1], None, None


# ----------------------------------------------------------------------------
# Full, unsimplified pure-JAX reference (mirrors the torch math exactly).
# ----------------------------------------------------------------------------
def reference_forward(params, x, edge_index, edge_weight):
    num_nodes = x.shape[0]
    periods = params["attention"].shape[1]
    hidden = params["u1"].shape[1]
    a_hat = build_a_hat(edge_index, edge_weight, num_nodes)
    probs = jax.nn.softmax(params["attention"][0])
    h0 = jnp.zeros((num_nodes, hidden), jnp.float32)
    acc = jnp.zeros((num_nodes, hidden), jnp.float32)
    for p in range(periods):
        xp = x[:, p:p + 1]
        cz = a_hat @ (xp @ params["conv_w"][0]) + params["conv_b"][0]
        cr = a_hat @ (xp @ params["conv_w"][1]) + params["conv_b"][1]
        ch = a_hat @ (xp @ params["conv_w"][2]) + params["conv_b"][2]
        z = jax.nn.sigmoid(cz @ params["u1"][0] + h0 @ params["u2"][0] + params["lb"][0])
        r = jax.nn.sigmoid(cr @ params["u1"][1] + h0 @ params["u2"][1] + params["lb"][1])
        h_t = jnp.tanh(ch @ params["u1"][2] + (h0 * r) @ params["u2"][2] + params["lb"][2])
        h_new = z * h0 + (1.0 - z) * h_t
        acc = acc + probs[p] * h_new
    return jnp.maximum(acc, 0.0) @ params["w_lin"] + params["b_lin"]


if __name__ == "__main__":
    key = jax.random.PRNGKey(0)
    N, periods, hidden, node_features = 16, 4, 32, 1
    k1, k2, k3 = jax.random.split(key, 3)

    params = init_params(k1, node_features, hidden, periods)
    x = jax.random.normal(k2, (N, periods), jnp.float32)

    # small bidirectional ring graph
    src = jnp.arange(N, dtype=jnp.int32)
    dst = (src + 1) % N
    edge_index = jnp.stack([jnp.concatenate([src, dst]),
                            jnp.concatenate([dst, src])], axis=0)
    edge_weight = jax.random.uniform(k3, (2 * N,), jnp.float32, 0.5, 1.5)

    h_in = jnp.zeros((N, hidden), jnp.float32)   # unused, signature parity
    c_in = jnp.zeros((N, hidden), jnp.float32)   # unused, signature parity

    ref = reference_forward(params, x, edge_index, edge_weight)

    # 1) f32 MXU operands: validates the exact algebraic folding.
    out_f32, _, _ = my_a3tgcn_forward(params, x, edge_index, edge_weight,
                                      h_in, c_in, mxu_dtype=jnp.float32)
    out_f32 = jax.block_until_ready(out_f32)
    assert out_f32.shape == (N, 1)
    assert jnp.allclose(out_f32, ref, atol=1e-3, rtol=1e-3), "f32 kernel mismatch"

    # 2) default fast path: bf16 MXU operands (A, X), f32 gate/elementwise math.
    out_bf16, _, _ = my_a3tgcn_forward(params, x, edge_index, edge_weight, h_in, c_in)
    out_bf16 = jax.block_until_ready(out_bf16)
    assert out_bf16.shape == (N, 1)
    assert jnp.allclose(out_bf16, ref, atol=2e-2, rtol=2e-2), "bf16 kernel mismatch"

    print("KERNEL_OK")
</pallas_src>

<mosaic_0001>
module attributes {stable_mosaic.version = 11 : i64} {
  func.func @kernel(%arg0: i32, %arg1: memref<8x128xf32, #tpu.memory_space<vmem>>, %arg2: memref<128x128xf32, #tpu.memory_space<vmem>>, %arg3: memref<1x128xf32, #tpu.memory_space<vmem>>, %arg4: memref<1x128xf32, #tpu.memory_space<vmem>>, %arg5: memref<1x128xf32, #tpu.memory_space<vmem>>, %arg6: memref<1x128xf32, #tpu.memory_space<vmem>>, %arg7: memref<128x128xf32, #tpu.memory_space<vmem>>, %arg8: memref<128x128xf32, #tpu.memory_space<vmem>>, %arg9: memref<1x128xf32, #tpu.memory_space<vmem>>, %arg10: memref<8x128xf32, #tpu.memory_space<vmem>>) attributes {dimension_semantics = [#tpu.dimension_semantics<parallel>], iteration_bounds = array<i64: 2>, scalar_prefetch = 0 : i64, scratch_operands = 0 : i64, tpu.core_type = #tpu.core_type<tc>, window_params = [{transform_indices = @transform_0, window_bounds = array<i64: 8, 128>}, {pipeline_mode = #tpu.pipeline_mode<synchronous>, transform_indices = @transform_1, window_bounds = array<i64: 128, 128>}, {pipeline_mode = #tpu.pipeline_mode<synchronous>, transform_indices = @transform_2, window_bounds = array<i64: 1, 128>}, {pipeline_mode = #tpu.pipeline_mode<synchronous>, transform_indices = @transform_3, window_bounds = array<i64: 1, 128>}, {pipeline_mode = #tpu.pipeline_mode<synchronous>, transform_indices = @transform_4, window_bounds = array<i64: 1, 128>}, {pipeline_mode = #tpu.pipeline_mode<synchronous>, transform_indices = @transform_5, window_bounds = array<i64: 1, 128>}, {pipeline_mode = #tpu.pipeline_mode<synchronous>, transform_indices = @transform_6, window_bounds = array<i64: 128, 128>}, {pipeline_mode = #tpu.pipeline_mode<synchronous>, transform_indices = @transform_7, window_bounds = array<i64: 128, 128>}, {pipeline_mode = #tpu.pipeline_mode<synchronous>, transform_indices = @transform_8, window_bounds = array<i64: 1, 128>}, {transform_indices = @transform_9, window_bounds = array<i64: 8, 128>}]} {
    %c0 = arith.constant 0 : index
    %c0_0 = arith.constant 0 : index
    %0 = vector.load %arg3[%c0, %c0_0] : memref<1x128xf32, #tpu.memory_space<vmem>>, vector<1x128xf32>
    %c0_1 = arith.constant 0 : index
    %c0_2 = arith.constant 0 : index
    %1 = vector.load %arg4[%c0_1, %c0_2] : memref<1x128xf32, #tpu.memory_space<vmem>>, vector<1x128xf32>
    %c0_3 = arith.constant 0 : index
    %c0_4 = arith.constant 0 : index
    %2 = vector.load %arg5[%c0_3, %c0_4] : memref<1x128xf32, #tpu.memory_space<vmem>>, vector<1x128xf32>
    %c0_5 = arith.constant 0 : index
    %c0_6 = arith.constant 0 : index
    %3 = vector.load %arg6[%c0_5, %c0_6] : memref<1x128xf32, #tpu.memory_space<vmem>>, vector<1x128xf32>
    %c0_7 = arith.constant 0 : index
    %c0_8 = arith.constant 0 : index
    %4 = vector.load %arg9[%c0_7, %c0_8] : memref<1x128xf32, #tpu.memory_space<vmem>>, vector<1x128xf32>
    %c0_i32 = arith.constant 0 : i32
    %c8_i32 = arith.constant 8 : i32
    %5 = arith.muli %c0_i32, %c8_i32 : i32
    %6 = tpu.assume_multiple %5, 8 : i32
    %7 = arith.index_cast %6 : i32 to index
    %c0_9 = arith.constant 0 : index
    %8 = vector.load %arg1[%7, %c0_9] : memref<8x128xf32, #tpu.memory_space<vmem>>, vector<8x128xf32>
    %c0_10 = arith.constant 0 : index
    %c0_11 = arith.constant 0 : index
    %9 = vector.load %arg2[%c0_10, %c0_11] : memref<128x128xf32, #tpu.memory_space<vmem>>, vector<128x128xf32>
    %cst = arith.constant dense<0.000000e+00> : vector<8x128xf32>
    %10 = tpu.matmul %8, %9, %cst {dimension_numbers = #tpu.dot_dimension_numbers<[1], [0], [0], [1], [0, 0, 1, 1], [], []>} : vector<8x128xf32>, vector<128x128xf32>, vector<8x128xf32> -> vector<8x128xf32>
    %11 = vector.broadcast %0 : vector<1x128xf32> to vector<8x128xf32>
    %12 = arith.mulf %10, %11 : vector<8x128xf32>
    %13 = vector.broadcast %1 : vector<1x128xf32> to vector<8x128xf32>
    %14 = arith.addf %12, %13 : vector<8x128xf32>
    %15 = arith.negf %14 : vector<8x128xf32>
    %16 = math.exp %15 : vector<8x128xf32>
    %cst_12 = arith.constant 1.000000e+00 : f32
    %17 = vector.broadcast %cst_12 : f32 to vector<8x128xf32>
    %18 = arith.addf %17, %16 : vector<8x128xf32>
    %19 = arith.divf %17, %18 : vector<8x128xf32>
    %20 = vector.broadcast %2 : vector<1x128xf32> to vector<8x128xf32>
    %21 = arith.mulf %10, %20 : vector<8x128xf32>
    %22 = vector.broadcast %3 : vector<1x128xf32> to vector<8x128xf32>
    %23 = arith.addf %21, %22 : vector<8x128xf32>
    %24 = math.tanh %23 : vector<8x128xf32>
    %cst_13 = arith.constant 1.000000e+00 : f32
    %25 = vector.broadcast %cst_13 : f32 to vector<8x128xf32>
    %26 = arith.subf %25, %19 : vector<8x128xf32>
    %27 = arith.mulf %26, %24 : vector<8x128xf32>
    %c0_14 = arith.constant 0 : index
    %c0_15 = arith.constant 0 : index
    %28 = vector.load %arg7[%c0_14, %c0_15] : memref<128x128xf32, #tpu.memory_space<vmem>>, vector<128x128xf32>
    %cst_16 = arith.constant dense<0.000000e+00> : vector<8x128xf32>
    %29 = tpu.matmul %27, %28, %cst_16 {dimension_numbers = #tpu.dot_dimension_numbers<[1], [0], [0], [1], [0, 0, 1, 1], [], []>} : vector<8x128xf32>, vector<128x128xf32>, vector<8x128xf32> -> vector<8x128xf32>
    %cst_17 = arith.constant 0.000000e+00 : f32
    %30 = vector.broadcast %cst_17 : f32 to vector<8x128xf32>
    %31 = arith.maximumf %29, %30 : vector<8x128xf32>
    %c0_18 = arith.constant 0 : index
    %c0_19 = arith.constant 0 : index
    %32 = vector.load %arg8[%c0_18, %c0_19] : memref<128x128xf32, #tpu.memory_space<vmem>>, vector<128x128xf32>
    %cst_20 = arith.constant dense<0.000000e+00> : vector<8x128xf32>
    %33 = tpu.matmul %31, %32, %cst_20 {dimension_numbers = #tpu.dot_dimension_numbers<[1], [0], [0], [1], [0, 0, 1, 1], [], []>} : vector<8x128xf32>, vector<128x128xf32>, vector<8x128xf32> -> vector<8x128xf32>
    %34 = vector.broadcast %4 : vector<1x128xf32> to vector<8x128xf32>
    %35 = arith.addf %33, %34 : vector<8x128xf32>
    %36 = arith.index_cast %6 : i32 to index
    %c0_21 = arith.constant 0 : index
    %37 = vector.load %arg10[%36, %c0_21] : memref<8x128xf32, #tpu.memory_space<vmem>>, vector<8x128xf32>
    tpu.vector_store %arg10[%36, %c0_21], %35 {strides = array<i32>} : memref<8x128xf32, #tpu.memory_space<vmem>>, vector<8x128xf32>,
    %c1_i32 = arith.constant 1 : i32
    return
  }
  func.func @transform_0(%arg0: i32) -> (i32, i32) {
    %c0_i32 = arith.constant 0 : i32
    %c0_i32_0 = arith.constant 0 : i32
    return %arg0, %c0_i32 : i32, i32
  }
  func.func @transform_1(%arg0: i32) -> (i32, i32) {
    %c0_i32 = arith.constant 0 : i32
    %c0_i32_0 = arith.constant 0 : i32
    %c0_i32_1 = arith.constant 0 : i32
    return %c0_i32, %c0_i32_0 : i32, i32
  }
  func.func @transform_2(%arg0: i32) -> (i32, i32) {
    %c0_i32 = arith.constant 0 : i32
    %c0_i32_0 = arith.constant 0 : i32
    %c0_i32_1 = arith.constant 0 : i32
    return %c0_i32, %c0_i32_0 : i32, i32
  }
  func.func @transform_3(%arg0: i32) -> (i32, i32) {
    %c0_i32 = arith.constant 0 : i32
    %c0_i32_0 = arith.constant 0 : i32
    %c0_i32_1 = arith.constant 0 : i32
    return %c0_i32, %c0_i32_0 : i32, i32
  }
  func.func @transform_4(%arg0: i32) -> (i32, i32) {
    %c0_i32 = arith.constant 0 : i32
    %c0_i32_0 = arith.constant 0 : i32
    %c0_i32_1 = arith.constant 0 : i32
    return %c0_i32, %c0_i32_0 : i32, i32
  }
  func.func @transform_5(%arg0: i32) -> (i32, i32) {
    %c0_i32 = arith.constant 0 : i32
    %c0_i32_0 = arith.constant 0 : i32
    %c0_i32_1 = arith.constant 0 : i32
    return %c0_i32, %c0_i32_0 : i32, i32
  }
  func.func @transform_6(%arg0: i32) -> (i32, i32) {
    %c0_i32 = arith.constant 0 : i32
    %c0_i32_0 = arith.constant 0 : i32
    %c0_i32_1 = arith.constant 0 : i32
    return %c0_i32, %c0_i32_0 : i32, i32
  }
  func.func @transform_7(%arg0: i32) -> (i32, i32) {
    %c0_i32 = arith.constant 0 : i32
    %c0_i32_0 = arith.constant 0 : i32
    %c0_i32_1 = arith.constant 0 : i32
    return %c0_i32, %c0_i32_0 : i32, i32
  }
  func.func @transform_8(%arg0: i32) -> (i32, i32) {
    %c0_i32 = arith.constant 0 : i32
    %c0_i32_0 = arith.constant 0 : i32
    %c0_i32_1 = arith.constant 0 : i32
    return %c0_i32, %c0_i32_0 : i32, i32
  }
  func.func @transform_9(%arg0: i32) -> (i32, i32) {
    %c0_i32 = arith.constant 0 : i32
    %c0_i32_0 = arith.constant 0 : i32
    return %arg0, %c0_i32 : i32, i32
  }
}

</mosaic_0001>

<llo_original>
// kernel: tpu_custom_call.1
$region0: #{tpu_custom_call.1}
  #allocation0 [shape = 'u32[]', space=smem, size = 0x4, offset = 0x4, fixed_abs, tag = 'smem constant byte address 0x4 - core index']
  #allocation1 [shape = 'u32[72,128]{1,0:T(1,128)}', space=vmem, size = 0x9000, scoped, tag = 'internal scratch']
  %s0 = inlined_call_operand.hbm [shape: f32[16,128], index: 0, kind: input, shape index: {}]
  %s1 = inlined_call_operand.hbm [shape: f32[128,128], index: 1, kind: input, shape index: {}]
  %s2 = inlined_call_operand.vmem [shape: f32[1,128], index: 2, kind: input, shape index: {}]
  %s3 = inlined_call_operand.vmem [shape: f32[1,128], index: 3, kind: input, shape index: {}]
  %s4 = inlined_call_operand.vmem [shape: f32[1,128], index: 4, kind: input, shape index: {}]
  %s5 = inlined_call_operand.vmem [shape: f32[1,128], index: 5, kind: input, shape index: {}]
  %s6 = inlined_call_operand.hbm [shape: f32[128,128], index: 6, kind: input, shape index: {}]
  %s7 = inlined_call_operand.hbm [shape: f32[128,128], index: 7, kind: input, shape index: {}]
  %s8 = inlined_call_operand.vmem [shape: f32[1,128], index: 8, kind: input, shape index: {}]
  %s9 = inlined_call_operand.hbm [shape: f32[16,128], index: 9, kind: output, shape index: {}]
  %s10 = sld [smem:[#allocation0]]
  $region85: #{tpu_custom_call.1} parent=0
    _
  %s12 = ssub.s32 1, %s10
  %s13 = scalar_select 0, %s12, %s10
  $region1: #{tpu_custom_call.1} parent=0
    #allocation2 [shape = 'u8[8192]{0}', space=vmem, size = 0x2000, scoped, tag = 'input window, operand 0']
    #allocation3 [shape = 's32[2]{0}', space=sflag, size = 0x8, scoped, tag = 'scoped memory for tpu_custom_call.1']
    #allocation4 [shape = 's32[2]{0}', space=sflag, size = 0x8, scoped, tag = 'scoped memory for tpu_custom_call.1']
    #allocation5 [shape = 'u8[65536]{0}', space=vmem, size = 0x10000, scoped, tag = 'input window, operand 1, single buffered']
    #allocation6 [shape = 's32[1]{0}', space=sflag, size = 0x4, scoped, tag = 'scoped memory for tpu_custom_call.1']
    #allocation7 [shape = 'u8[65536]{0}', space=vmem, size = 0x10000, scoped, tag = 'input window, operand 6, single buffered']
    #allocation8 [shape = 'u8[65536]{0}', space=vmem, size = 0x10000, scoped, tag = 'input window, operand 7, single buffered']
    #allocation9 [shape = 's32[1]{0}', space=sflag, size = 0x4, scoped, tag = 'scoped memory for tpu_custom_call.1']
    #allocation10 [shape = 'u8[8192]{0}', space=vmem, size = 0x2000, scoped, tag = 'output window, operand 0']
    %14 = vsyncpa [#allocation3], 0
    %s15 = scalar_lea.sflag [#allocation3], 1
    %16 = vsyncpa %s15, 0
    %17 = vsyncpa [#allocation6], 0
    %18 = vsyncpa [#allocation9], 0
    %19 = vsyncpa [#allocation4], 0
    %s20 = scalar_lea.sflag [#allocation4], 1
    %21 = vsyncpa %s20, 0
    loop: start=0, step=1, limit=4
    $region2: #{tpu_custom_call.1} parent=1 // loop_pre_header
      _
    $region3: #{tpu_custom_call.1} parent=1 // loop_header
      %s23 = sphi 0, %s27
      %p24 = scmp.ge.s32.totalorder %s23, 4
      %s33 = sphi 0, %s35
      %s36 = sphi 0, %s33
      %s37 = sphi 0, %s36
      %s53 = sphi 0, %s37
      %s57 = sphi 0, %s57
      %s59 = sphi 0, %s57
      %s60 = sphi 0, %s59
      %s74 = sphi 0, %s60
      %s78 = sphi 0, %s78
      %s80 = sphi 0, %s78
      %s81 = sphi 0, %s80
      %s95 = sphi 0, %s81
      %s99 = sphi 0, %s99
      %s101 = sphi 0, %s99
      %s102 = sphi 0, %s101
      %s116 = sphi 0, %s102
      %s120 = sphi 0, %s120
      %s122 = sphi 0, %s120
      %s123 = sphi 0, %s122
      %s137 = sphi 0, %s123
      %s141 = sphi 0, %s141
      %s143 = sphi 0, %s141
      %s144 = sphi 0, %s143
      %s158 = sphi 0, %s144
      %s162 = sphi 0, %s162
      %s164 = sphi 0, %s162
      %s165 = sphi 0, %s164
      %s179 = sphi 0, %s165
      %s183 = sphi 0, %s183
      %s185 = sphi 0, %s183
      %s186 = sphi 0, %s185
      %s200 = sphi 0, %s186
      %s204 = sphi 0, %s204
      %s206 = sphi 0, %s204
      %s207 = sphi 0, %s206
      %s221 = sphi 0, %s207
      %s227 = sphi 0, %s229
      %s230 = sphi 0, %s227
      %s231 = sphi 0, %s230
      %s247 = sphi 0, %s231
    $region4: #{tpu_custom_call.1} parent=1 // loop_header_branch
      %26 = sbr.rel (%p24) target = $region8
    $region5: #{tpu_custom_call.1} parent=1 // loop_body
      %s28 = ssub.s32 %s23, 1
      %s29 = ssub.s32 %s23, 2
      %s30 = sadd.s32 %s23, 1
      %s31 = ssub.s32 %s23, %s30
      %p32 = scmp.eq.s32.totalorder %s31, 0
      %s34 = sadd.s32 %s33, 1
      %s35 = scalar_select %p32, %s33, %s34
      %p38 = pneg %p32
      %p39 = scmp.eq.s32.totalorder %s23, 1
      %p40 = por %p38, %p39
      %p41 = scmp.ne.s32.totalorder %s33, %s36
      %p42 = scmp.eq.s32.totalorder %s23, 0
      %p43 = por %p41, %p42
      %p44 = scmp.ne.s32.totalorder %s33, %s36
      %p45 = scmp.eq.s32.totalorder %s28, 1
      %p46 = por %p44, %p45
      %p47 = scmp.ne.s32.totalorder %s36, %s37
      %p48 = scmp.eq.s32.totalorder %s28, 0
      %p49 = por %p47, %p48
      %p50 = scmp.ne.s32.totalorder %s36, %s37
      %p51 = scmp.eq.s32.totalorder %s29, 1
      %p52 = por %p50, %p51
      %p54 = scmp.ne.s32.totalorder %s37, %s53
      %p55 = scmp.eq.s32.totalorder %s29, 0
      %p56 = por %p54, %p55
      %s58 = sadd.s32 %s57, 1
      %p61 = scmp.eq.s32.totalorder %s23, 1
      %p62 = scmp.ne.s32.totalorder %s57, %s59
      %p63 = scmp.eq.s32.totalorder %s23, 0
      %p64 = por %p62, %p63
      %p65 = scmp.ne.s32.totalorder %s57, %s59
      %p66 = scmp.eq.s32.totalorder %s28, 1
      %p67 = por %p65, %p66
      %p68 = scmp.ne.s32.totalorder %s59, %s60
      %p69 = scmp.eq.s32.totalorder %s28, 0
      %p70 = por %p68, %p69
      %p71 = scmp.ne.s32.totalorder %s59, %s60
      %p72 = scmp.eq.s32.totalorder %s29, 1
      %p73 = por %p71, %p72
      %p75 = scmp.ne.s32.totalorder %s60, %s74
      %p76 = scmp.eq.s32.totalorder %s29, 0
      %p77 = por %p75, %p76
      %s79 = sadd.s32 %s78, 1
      %p82 = scmp.eq.s32.totalorder %s23, 1
      %p83 = scmp.ne.s32.totalorder %s78, %s80
      %p84 = scmp.eq.s32.totalorder %s23, 0
      %p85 = por %p83, %p84
      %p86 = scmp.ne.s32.totalorder %s78, %s80
      %p87 = scmp.eq.s32.totalorder %s28, 1
      %p88 = por %p86, %p87
      %p89 = scmp.ne.s32.totalorder %s80, %s81
      %p90 = scmp.eq.s32.totalorder %s28, 0
      %p91 = por %p89, %p90
      %p92 = scmp.ne.s32.totalorder %s80, %s81
      %p93 = scmp.eq.s32.totalorder %s29, 1
      %p94 = por %p92, %p93
      %p96 = scmp.ne.s32.totalorder %s81, %s95
      %p97 = scmp.eq.s32.totalorder %s29, 0
      %p98 = por %p96, %p97
      %s100 = sadd.s32 %s99, 1
      %p103 = scmp.eq.s32.totalorder %s23, 1
      %p104 = scmp.ne.s32.totalorder %s99, %s101
      %p105 = scmp.eq.s32.totalorder %s23, 0
      %p106 = por %p104, %p105
      %p107 = scmp.ne.s32.totalorder %s99, %s101
      %p108 = scmp.eq.s32.totalorder %s28, 1
      %p109 = por %p107, %p108
      %p110 = scmp.ne.s32.totalorder %s101, %s102
      %p111 = scmp.eq.s32.totalorder %s28, 0
      %p112 = por %p110, %p111
      %p113 = scmp.ne.s32.totalorder %s101, %s102
      %p114 = scmp.eq.s32.totalorder %s29, 1
      %p115 = por %p113, %p114
      %p117 = scmp.ne.s32.totalorder %s102, %s116
      %p118 = scmp.eq.s32.totalorder %s29, 0
      %p119 = por %p117, %p118
      %s121 = sadd.s32 %s120, 1
      %p124 = scmp.eq.s32.totalorder %s23, 1
      %p125 = scmp.ne.s32.totalorder %s120, %s122
      %p126 = scmp.eq.s32.totalorder %s23, 0
      %p127 = por %p125, %p126
      %p128 = scmp.ne.s32.totalorder %s120, %s122
      %p129 = scmp.eq.s32.totalorder %s28, 1
      %p130 = por %p128, %p129
      %p131 = scmp.ne.s32.totalorder %s122, %s123
      %p132 = scmp.eq.s32.totalorder %s28, 0
      %p133 = por %p131, %p132
      %p134 = scmp.ne.s32.totalorder %s122, %s123
      %p135 = scmp.eq.s32.totalorder %s29, 1
      %p136 = por %p134, %p135
      %p138 = scmp.ne.s32.totalorder %s123, %s137
      %p139 = scmp.eq.s32.totalorder %s29, 0
      %p140 = por %p138, %p139
      %s142 = sadd.s32 %s141, 1
      %p145 = scmp.eq.s32.totalorder %s23, 1
      %p146 = scmp.ne.s32.totalorder %s141, %s143
      %p147 = scmp.eq.s32.totalorder %s23, 0
      %p148 = por %p146, %p147
      %p149 = scmp.ne.s32.totalorder %s141, %s143
      %p150 = scmp.eq.s32.totalorder %s28, 1
      %p151 = por %p149, %p150
      %p152 = scmp.ne.s32.totalorder %s143, %s144
      %p153 = scmp.eq.s32.totalorder %s28, 0
      %p154 = por %p152, %p153
      %p155 = scmp.ne.s32.totalorder %s143, %s144
      %p156 = scmp.eq.s32.totalorder %s29, 1
      %p157 = por %p155, %p156
      %p159 = scmp.ne.s32.totalorder %s144, %s158
      %p160 = scmp.eq.s32.totalorder %s29, 0
      %p161 = por %p159, %p160
      %s163 = sadd.s32 %s162, 1
      %p166 = scmp.eq.s32.totalorder %s23, 1
      %p167 = scmp.ne.s32.totalorder %s162, %s164
      %p168 = scmp.eq.s32.totalorder %s23, 0
      %p169 = por %p167, %p168
      %p170 = scmp.ne.s32.totalorder %s162, %s164
      %p171 = scmp.eq.s32.totalorder %s28, 1
      %p172 = por %p170, %p171
      %p173 = scmp.ne.s32.totalorder %s164, %s165
      %p174 = scmp.eq.s32.totalorder %s28, 0
      %p175 = por %p173, %p174
      %p176 = scmp.ne.s32.totalorder %s164, %s165
      %p177 = scmp.eq.s32.totalorder %s29, 1
      %p178 = por %p176, %p177
      %p180 = scmp.ne.s32.totalorder %s165, %s179
      %p181 = scmp.eq.s32.totalorder %s29, 0
      %p182 = por %p180, %p181
      %s184 = sadd.s32 %s183, 1
      %p187 = scmp.eq.s32.totalorder %s23, 1
      %p188 = scmp.ne.s32.totalorder %s183, %s185
      %p189 = scmp.eq.s32.totalorder %s23, 0
      %p190 = por %p188, %p189
      %p191 = scmp.ne.s32.totalorder %s183, %s185
      %p192 = scmp.eq.s32.totalorder %s28, 1
      %p193 = por %p191, %p192
      %p194 = scmp.ne.s32.totalorder %s185, %s186
      %p195 = scmp.eq.s32.totalorder %s28, 0
      %p196 = por %p194, %p195
      %p197 = scmp.ne.s32.totalorder %s185, %s186
      %p198 = scmp.eq.s32.totalorder %s29, 1
      %p199 = por %p197, %p198
      %p201 = scmp.ne.s32.totalorder %s186, %s200
      %p202 = scmp.eq.s32.totalorder %s29, 0
      %p203 = por %p201, %p202
      %s205 = sadd.s32 %s204, 1
      %p208 = scmp.eq.s32.totalorder %s23, 1
      %p209 = scmp.ne.s32.totalorder %s204, %s206
      %p210 = scmp.eq.s32.totalorder %s23, 0
      %p211 = por %p209, %p210
      %p212 = scmp.ne.s32.totalorder %s204, %s206
      %p213 = scmp.eq.s32.totalorder %s28, 1
      %p214 = por %p212, %p213
      %p215 = scmp.ne.s32.totalorder %s206, %s207
      %p216 = scmp.eq.s32.totalorder %s28, 0
      %p217 = por %p215, %p216
      %p218 = scmp.ne.s32.totalorder %s206, %s207
      %p219 = scmp.eq.s32.totalorder %s29, 1
      %p220 = por %p218, %p219
      %p222 = scmp.ne.s32.totalorder %s207, %s221
      %p223 = scmp.eq.s32.totalorder %s29, 0
      %p224 = por %p222, %p223
      %s225 = ssub.s32 %s23, %s30
      %p226 = scmp.eq.s32.totalorder %s225, 0
      %s228 = sadd.s32 %s227, 1
      %s229 = scalar_select %p226, %s227, %s228
      %p232 = pneg %p226
      %p233 = scmp.eq.s32.totalorder %s23, 1
      %p234 = por %p232, %p233
      %p235 = scmp.ne.s32.totalorder %s227, %s230
      %p236 = scmp.eq.s32.totalorder %s23, 0
      %p237 = por %p235, %p236
      %p238 = scmp.ne.s32.totalorder %s227, %s230
      %p239 = scmp.eq.s32.totalorder %s28, 1
      %p240 = por %p238, %p239
      %p241 = scmp.ne.s32.totalorder %s230, %s231
      %p242 = scmp.eq.s32.totalorder %s28, 0
      %p243 = por %p241, %p242
      %p244 = scmp.ne.s32.totalorder %s230, %s231
      %p245 = scmp.eq.s32.totalorder %s29, 1
      %p246 = por %p244, %p245
      %p248 = scmp.ne.s32.totalorder %s231, %s247
      %p249 = scmp.eq.s32.totalorder %s29, 0
      %p250 = por %p248, %p249
      %p251 = scmp.le.s32.totalorder 1, %s23
      %p252 = scmp.lt.s32.totalorder %s23, 3
      %p253 = pnand %p251, %p252
      %p254 = pneg %p253
      // Predicated region
      $region9: #{tpu_custom_call.1} parent=5 // pred_check
        _
      $region10: #{tpu_custom_call.1} parent=5 // pred_check_branch
        %256 = sbr.rel (%p253) target = $region12
      $region11: #{tpu_custom_call.1} parent=5 // pred_region
        %s257 = ssub.s32 %s23, 1
        // Predicated region
        $region13: #{tpu_custom_call.1} parent=11 // pred_check
          %p258 = pneg %p70
        $region14: #{tpu_custom_call.1} parent=11 // pred_check_branch
          %260 = sbr.rel (%p258) target = $region16
        $region15: #{tpu_custom_call.1} parent=11 // pred_region
          %262 = vsyncadd [#allocation6], 0
          %s263 = sshll.u32 %s1, 4
          %s264 = int_to_ptr.hbm [resolvable:$true] %s263
          %s265 = sshll.u32 [#allocation5], 4
          %s266 = int_to_ptr.vmem [resolvable:$true] %s265
          %271 = dma.hbm_to_vmem [thread:$0]  %s264, 2048, %s266, [#allocation6], 128, 128, 8
        $region16: #{tpu_custom_call.1} parent=11 // pred_fallthru
          _
        // Predicated region
        $region17: #{tpu_custom_call.1} parent=11 // pred_check
          %p272 = pneg %p91
        $region18: #{tpu_custom_call.1} parent=11 // pred_check_branch
          %274 = sbr.rel (%p272) target = $region20
        $region19: #{tpu_custom_call.1} parent=11 // pred_region
          _
        $region20: #{tpu_custom_call.1} parent=11 // pred_fallthru
          _
        // Predicated region
        $region21: #{tpu_custom_call.1} parent=11 // pred_check
          %p275 = pneg %p112
        $region22: #{tpu_custom_call.1} parent=11 // pred_check_branch
          %277 = sbr.rel (%p275) target = $region24
        $region23: #{tpu_custom_call.1} parent=11 // pred_region
          _
        $region24: #{tpu_custom_call.1} parent=11 // pred_fallthru
          _
        // Predicated region
        $region25: #{tpu_custom_call.1} parent=11 // pred_check
          %p278 = pneg %p133
        $region26: #{tpu_custom_call.1} parent=11 // pred_check_branch
          %280 = sbr.rel (%p278) target = $region28
        $region27: #{tpu_custom_call.1} parent=11 // pred_region
          _
        $region28: #{tpu_custom_call.1} parent=11 // pred_fallthru
          _
        // Predicated region
        $region29: #{tpu_custom_call.1} parent=11 // pred_check
          %p281 = pneg %p154
        $region30: #{tpu_custom_call.1} parent=11 // pred_check_branch
          %283 = sbr.rel (%p281) target = $region32
        $region31: #{tpu_custom_call.1} parent=11 // pred_region
          _
        $region32: #{tpu_custom_call.1} parent=11 // pred_fallthru
          _
        // Predicated region
        $region33: #{tpu_custom_call.1} parent=11 // pred_check
          %p284 = pneg %p175
        $region34: #{tpu_custom_call.1} parent=11 // pred_check_branch
          %286 = sbr.rel (%p284) target = $region36
        $region35: #{tpu_custom_call.1} parent=11 // pred_region
          %288 = vsyncadd [#allocation6], 0
          %s289 = sshll.u32 %s6, 4
          %s290 = int_to_ptr.hbm [resolvable:$true] %s289
          %s291 = sshll.u32 [#allocation7], 4
          %s292 = int_to_ptr.vmem [resolvable:$true] %s291
          %297 = dma.hbm_to_vmem [thread:$0]  %s290, 2048, %s292, [#allocation6], 128, 128, 8
        $region36: #{tpu_custom_call.1} parent=11 // pred_fallthru
          _
        // Predicated region
        $region37: #{tpu_custom_call.1} parent=11 // pred_check
          %p298 = pneg %p196
        $region38: #{tpu_custom_call.1} parent=11 // pred_check_branch
          %300 = sbr.rel (%p298) target = $region40
        $region39: #{tpu_custom_call.1} parent=11 // pred_region
          %302 = vsyncadd [#allocation9], 0
          %s303 = sshll.u32 %s7, 4
          %s304 = int_to_ptr.hbm [resolvable:$true] %s303
          %s305 = sshll.u32 [#allocation8], 4
          %s306 = int_to_ptr.vmem [resolvable:$true] %s305
          %311 = dma.hbm_to_vmem [thread:$0]  %s304, 2048, %s306, [#allocation9], 128, 128, 8
        $region40: #{tpu_custom_call.1} parent=11 // pred_fallthru
          _
        // Predicated region
        $region41: #{tpu_custom_call.1} parent=11 // pred_check
          %p312 = pneg %p217
        $region42: #{tpu_custom_call.1} parent=11 // pred_check_branch
          %314 = sbr.rel (%p312) target = $region44
        $region43: #{tpu_custom_call.1} parent=11 // pred_region
          _
        $region44: #{tpu_custom_call.1} parent=11 // pred_fallthru
          _
      $region12: #{tpu_custom_call.1} parent=5 // pred_fallthru
        _
      %p315 = scmp.lt.s32.totalorder %s23, 2
      // Predicated region
      $region45: #{tpu_custom_call.1} parent=5 // pred_check
        %p316 = pneg %p315
      $region46: #{tpu_custom_call.1} parent=5 // pred_check_branch
        %318 = sbr.rel (%p316) target = $region48
      $region47: #{tpu_custom_call.1} parent=5 // pred_region
        // Predicated region
        $region49: #{tpu_custom_call.1} parent=47 // pred_check
          %p319 = pneg %p43
        $region50: #{tpu_custom_call.1} parent=47 // pred_check_branch
          %321 = sbr.rel (%p319) target = $region52
        $region51: #{tpu_custom_call.1} parent=47 // pred_region
          %s322 = sand.u32 %s33, 1
          %s323 = scalar_lea.sflag [#allocation3], %s322
          %s324 = sand.u32 %s33, 1
          %s325 = smul.addr %s324, 8
          %s326 = scalar_lea.vmem [#allocation2], %s325
          %328 = vsyncadd %s323, 0
          %s329 = smul.addr %s23, 8
          %s330 = scalar_lea.hbm %s0, %s329
          %s332 = sshll.u32 %s330, 4
          %s333 = int_to_ptr.hbm [resolvable:$true] %s332
          %s334 = sshll.u32 %s326, 4
          %s335 = int_to_ptr.vmem [resolvable:$true] %s334
          %337 = dma.hbm_to_vmem [thread:$0]  %s333, 128, %s335, %s323
        $region52: #{tpu_custom_call.1} parent=47 // pred_fallthru
          _
      $region48: #{tpu_custom_call.1} parent=5 // pred_fallthru
        _
      %p338 = scmp.le.s32.totalorder 1, %s23
      %p339 = scmp.lt.s32.totalorder %s23, 3
      %p340 = pnand %p338, %p339
      %p341 = pneg %p340
      // Predicated region
      $region53: #{tpu_custom_call.1} parent=5 // pred_check
        _
      $region54: #{tpu_custom_call.1} parent=5 // pred_check_branch
        %343 = sbr.rel (%p340) target = $region56
      $region55: #{tpu_custom_call.1} parent=5 // pred_region
        %s344 = ssub.s32 %s23, 1
        %s345 = sand.u32 %s36, 1
        %s346 = scalar_lea.sflag [#allocation3], %s345
        %s347 = sand.u32 %s36, 1
        %s348 = smul.addr %s347, 8
        %s349 = scalar_lea.vmem [#allocation2], %s348
        // Predicated region
        $region57: #{tpu_custom_call.1} parent=55 // pred_check
          %p350 = pneg %p49
        $region58: #{tpu_custom_call.1} parent=55 // pred_check_branch
          %352 = sbr.rel (%p350) target = $region60
        $region59: #{tpu_custom_call.1} parent=55 // pred_region
          %354 = dma.done %s346, 128
        $region60: #{tpu_custom_call.1} parent=55 // pred_fallthru
          _
        // Predicated region
        $region61: #{tpu_custom_call.1} parent=55 // pred_check
          %p355 = pneg %p70
        $region62: #{tpu_custom_call.1} parent=55 // pred_check_branch
          %357 = sbr.rel (%p355) target = $region64
        $region63: #{tpu_custom_call.1} parent=55 // pred_region
          %359 = dma.done [#allocation6], 2048
        $region64: #{tpu_custom_call.1} parent=55 // pred_fallthru
          _
        // Predicated region
        $region65: #{tpu_custom_call.1} parent=55 // pred_check
          %p360 = pneg %p175
        $region66: #{tpu_custom_call.1} parent=55 // pred_check_branch
          %362 = sbr.rel (%p360) target = $region68
        $region67: #{tpu_custom_call.1} parent=55 // pred_region
          %364 = dma.done [#allocation6], 2048
        $region68: #{tpu_custom_call.1} parent=55 // pred_fallthru
          _
        // Predicated region
        $region69: #{tpu_custom_call.1} parent=55 // pred_check
          %p365 = pneg %p196
        $region70: #{tpu_custom_call.1} parent=55 // pred_check_branch
          %367 = sbr.rel (%p365) target = $region72
        $region71: #{tpu_custom_call.1} parent=55 // pred_region
          %369 = dma.done [#allocation9], 2048
        $region72: #{tpu_custom_call.1} parent=55 // pred_fallthru
          _
        %s370 = sand.u32 %s36, 1
        %s371 = scalar_lea.sflag [#allocation3], %s370
        %s372 = sand.u32 %s36, 1
        %s373 = smul.addr %s372, 8
        %s374 = scalar_lea.vmem [#allocation2], %s373
        %p375 = pneg %p49
        %p376 = pneg %p46
        %p377 = pneg %p70
        %p378 = pneg %p67
        %p379 = pneg %p91
        %p380 = pneg %p88
        %p381 = pneg %p112
        %p382 = pneg %p109
        %p383 = pneg %p133
        %p384 = pneg %p130
        %p385 = pneg %p154
        %p386 = pneg %p151
        %p387 = pneg %p175
        %p388 = pneg %p172
        %p389 = pneg %p196
        %p390 = pneg %p193
        %p391 = pneg %p217
        %p392 = pneg %p214
        %p393 = pneg %p243
        %p394 = pneg %p240
        %s395 = sand.u32 %s230, 1
        %s396 = scalar_lea.sflag [#allocation4], %s395
        %s397 = sand.u32 %s230, 1
        %s398 = smul.addr %s397, 8
        %s399 = scalar_lea.vmem [#allocation10], %s398
        %v400 = vld [vmem:[%s2] sm:$0x1]
        %v401 = vld [vmem:[%s3] sm:$0x1]
        %v402 = vld [vmem:[%s4] sm:$0x1]
        %v403 = vld [vmem:[%s5] sm:$0x1]
        %v404 = vld [vmem:[%s8] sm:$0x1]
        %v405 = vld [vmem:[%s349] sm:$0xff]
        %v406 = vld [vmem:[#allocation5] sm:$0xff]
        %v407 = vld [vmem:[#allocation5 + $0x8] sm:$0xff]
        %v408 = vld [vmem:[#allocation5 + $0x10] sm:$0xff]
        %v409 = vld [vmem:[#allocation5 + $0x18] sm:$0xff]
        %v410 = vld [vmem:[#allocation5 + $0x20] sm:$0xff]
        %v411 = vld [vmem:[#allocation5 + $0x28] sm:$0xff]
        %v412 = vld [vmem:[#allocation5 + $0x30] sm:$0xff]
        %v413 = vld [vmem:[#allocation5 + $0x38] sm:$0xff]
        %v414 = vld [vmem:[#allocation5 + $0x40] sm:$0xff]
        %v415 = vld [vmem:[#allocation5 + $0x48] sm:$0xff]
        %v416 = vld [vmem:[#allocation5 + $0x50] sm:$0xff]
        %v417 = vld [vmem:[#allocation5 + $0x58] sm:$0xff]
        %v418 = vld [vmem:[#allocation5 + $0x60] sm:$0xff]
        %v419 = vld [vmem:[#allocation5 + $0x68] sm:$0xff]
        %v420 = vld [vmem:[#allocation5 + $0x70] sm:$0xff]
        %v421 = vld [vmem:[#allocation5 + $0x78] sm:$0xff]
        %422 = vmatpush.msra.mxu0 %v421
        %423 = vmatpush.msra.mxu0 %v420
        %424 = vmatpush.msra.mxu0 %v419
        %425 = vmatpush.msra.mxu0 %v418
        %426 = vmatpush.msra.mxu0 %v417
        %427 = vmatpush.msra.mxu0 %v416
        %428 = vmatpush.msra.mxu0 %v415
        %429 = vmatpush.msra.mxu0 %v414
        %430 = vmatpush.msra.mxu0 %v413
        %431 = vmatpush.msra.mxu0 %v412
        %432 = vmatpush.msra.mxu0 %v411
        %433 = vmatpush.msra.mxu0 %v410
        %434 = vmatpush.msra.mxu0 %v409
        %435 = vmatpush.msra.mxu0 %v408
        %436 = vmatpush.msra.mxu0 %v407
        %437 = vmatpush.msra.mxu0 %v406
        %438 = vmatmul.f32.gmra.mxu0 %v405
        %v439 = vpop.f32.mrf.mxu0
        %v440 = vadd.f32 0.0, %v439
        %441 = vdwg.mxu0
        %v443 = vperm.slane %v400, 0
        %v445 = vmul.f32 %v440, %v443
        %v447 = vperm.slane %v401, 0
        %v449 = vadd.f32 %v445, %v447
        %v450 = vxor.u32 %v449, 2147483648
        %v451 = vmul.f32 %v450, 1.442695
        %v452 = vpow.pop %v451
        %v453 = vadd.f32 %v452, 1.0
        %v454 = vrcp.pop %v453
        %v455 = vmul.f32 %v453, %v454
        %v456 = vsub.f32 1.0, %v455
        %v457 = vmul.f32 %v454, %v456
        %v458 = vadd.f32 %v454, %v457
        %vm459 = vweird.f32 %v453
        %vm460 = vweird.f32 %v454
        %vm461 = vmor %vm459, %vm460
        %v462 = vsel %vm461, %v454, %v458
        %v463 = vand.u32 2147483647, %v453
        %vm464 = vcmp.eq.f32.partialorder %v463, 8.507059e+37
        %v465 = vand.u32 %v453, 2147483648
        %v466 = vor.u32 1.1754944e-38, %v465
        %v467 = vsel %vm464, %v466, %v462
        %v468 = vmul.f32 1.0, %v467
        %v470 = vperm.slane %v402, 0
        %v472 = vmul.f32 %v440, %v470
        %v474 = vperm.slane %v403, 0
        %v476 = vadd.f32 %v472, %v474
        %v477 = vtanh.pop %v476
        %v478 = vsub.f32 1.0, %v468
        %v479 = vmul.f32 %v478, %v477
        %v480 = vld [vmem:[#allocation7] sm:$0xff]
        %v481 = vld [vmem:[#allocation7 + $0x8] sm:$0xff]
        %v482 = vld [vmem:[#allocation7 + $0x10] sm:$0xff]
        %v483 = vld [vmem:[#allocation7 + $0x18] sm:$0xff]
        %v484 = vld [vmem:[#allocation7 + $0x20] sm:$0xff]
        %v485 = vld [vmem:[#allocation7 + $0x28] sm:$0xff]
        %v486 = vld [vmem:[#allocation7 + $0x30] sm:$0xff]
        %v487 = vld [vmem:[#allocation7 + $0x38] sm:$0xff]
        %v488 = vld [vmem:[#allocation7 + $0x40] sm:$0xff]
        %v489 = vld [vmem:[#allocation7 + $0x48] sm:$0xff]
        %v490 = vld [vmem:[#allocation7 + $0x50] sm:$0xff]
        %v491 = vld [vmem:[#allocation7 + $0x58] sm:$0xff]
        %v492 = vld [vmem:[#allocation7 + $0x60] sm:$0xff]
        %v493 = vld [vmem:[#allocation7 + $0x68] sm:$0xff]
        %v494 = vld [vmem:[#allocation7 + $0x70] sm:$0xff]
        %v495 = vld [vmem:[#allocation7 + $0x78] sm:$0xff]
        %496 = vmatpush.msra.mxu0 %v495
        %497 = vmatpush.msra.mxu0 %v494
        %498 = vmatpush.msra.mxu0 %v493
        %499 = vmatpush.msra.mxu0 %v492
        %500 = vmatpush.msra.mxu0 %v491
        %501 = vmatpush.msra.mxu0 %v490
        %502 = vmatpush.msra.mxu0 %v489
        %503 = vmatpush.msra.mxu0 %v488
        %504 = vmatpush.msra.mxu0 %v487
        %505 = vmatpush.msra.mxu0 %v486
        %506 = vmatpush.msra.mxu0 %v485
        %507 = vmatpush.msra.mxu0 %v484
        %508 = vmatpush.msra.mxu0 %v483
        %509 = vmatpush.msra.mxu0 %v482
        %510 = vmatpush.msra.mxu0 %v481
        %511 = vmatpush.msra.mxu0 %v480
        %512 = vmatmul.f32.gmra.mxu0 %v479
        %v513 = vpop.f32.mrf.mxu0
        %v514 = vadd.f32 0.0, %v513
        %515 = vdwg.mxu0
        %v516 = vmax.f32 %v514, 0.0
        %v517 = vld [vmem:[#allocation8] sm:$0xff]
        %v518 = vld [vmem:[#allocation8 + $0x8] sm:$0xff]
        %v519 = vld [vmem:[#allocation8 + $0x10] sm:$0xff]
        %v520 = vld [vmem:[#allocation8 + $0x18] sm:$0xff]
        %v521 = vld [vmem:[#allocation8 + $0x20] sm:$0xff]
        %v522 = vld [vmem:[#allocation8 + $0x28] sm:$0xff]
        %v523 = vld [vmem:[#allocation8 + $0x30] sm:$0xff]
        %v524 = vld [vmem:[#allocation8 + $0x38] sm:$0xff]
        %v525 = vld [vmem:[#allocation8 + $0x40] sm:$0xff]
        %v526 = vld [vmem:[#allocation8 + $0x48] sm:$0xff]
        %v527 = vld [vmem:[#allocation8 + $0x50] sm:$0xff]
        %v528 = vld [vmem:[#allocation8 + $0x58] sm:$0xff]
        %v529 = vld [vmem:[#allocation8 + $0x60] sm:$0xff]
        %v530 = vld [vmem:[#allocation8 + $0x68] sm:$0xff]
        %v531 = vld [vmem:[#allocation8 + $0x70] sm:$0xff]
        %v532 = vld [vmem:[#allocation8 + $0x78] sm:$0xff]
        %v534 = vperm.slane %v404, 0
        %536 = vmatpush.msra.mxu0 %v532
        %537 = vmatpush.msra.mxu0 %v531
        %538 = vmatpush.msra.mxu0 %v530
        %539 = vmatpush.msra.mxu0 %v529
        %540 = vmatpush.msra.mxu0 %v528
        %541 = vmatpush.msra.mxu0 %v527
        %542 = vmatpush.msra.mxu0 %v526
        %543 = vmatpush.msra.mxu0 %v525
        %544 = vmatpush.msra.mxu0 %v524
        %545 = vmatpush.msra.mxu0 %v523
        %546 = vmatpush.msra.mxu0 %v522
        %547 = vmatpush.msra.mxu0 %v521
        %548 = vmatpush.msra.mxu0 %v520
        %549 = vmatpush.msra.mxu0 %v519
        %550 = vmatpush.msra.mxu0 %v518
        %551 = vmatpush.msra.mxu0 %v517
        %552 = vmatmul.f32.gmra.mxu0 %v516
        %v553 = vpop.f32.mrf.mxu0
        %v554 = vadd.f32 %v534, %v553
        %555 = vdwg.mxu0
        %556 = vst [vmem:[%s399] sm:$0xff] %v554
        %s557 = sand.u32 %s230, 1
        %s558 = scalar_lea.sflag [#allocation4], %s557
        %s559 = sand.u32 %s230, 1
        %s560 = smul.addr %s559, 8
        %s561 = scalar_lea.vmem [#allocation10], %s560
        // Predicated region
        $region73: #{tpu_custom_call.1} parent=55 // pred_check
          %p562 = pneg %p240
        $region74: #{tpu_custom_call.1} parent=55 // pred_check_branch
          %564 = sbr.rel (%p562) target = $region76
        $region75: #{tpu_custom_call.1} parent=55 // pred_region
          %566 = vsyncadd %s558, 0
          %s567 = smul.addr %s28, 8
          %s568 = scalar_lea.hbm %s9, %s567
          %s570 = sshll.u32 %s561, 4
          %s571 = int_to_ptr.vmem [resolvable:$true] %s570
          %s572 = sshll.u32 %s568, 4
          %s573 = int_to_ptr.hbm [resolvable:$true] %s572
          %575 = dma.vmem_to_hbm [thread:$0]  %s571, 128, %s573, %s558
        $region76: #{tpu_custom_call.1} parent=55 // pred_fallthru
          _
      $region56: #{tpu_custom_call.1} parent=5 // pred_fallthru
        _
      %p576 = scmp.le.s32.totalorder 2, %s23
      // Predicated region
      $region77: #{tpu_custom_call.1} parent=5 // pred_check
        %p577 = pneg %p576
      $region78: #{tpu_custom_call.1} parent=5 // pred_check_branch
        %579 = sbr.rel (%p577) target = $region80
      $region79: #{tpu_custom_call.1} parent=5 // pred_region
        %s580 = ssub.s32 %s23, 2
        // Predicated region
        $region81: #{tpu_custom_call.1} parent=79 // pred_check
          %p581 = pneg %p246
        $region82: #{tpu_custom_call.1} parent=79 // pred_check_branch
          %583 = sbr.rel (%p581) target = $region84
        $region83: #{tpu_custom_call.1} parent=79 // pred_region
          %s584 = sand.u32 %s231, 1
          %s585 = scalar_lea.sflag [#allocation4], %s584
          %s586 = sand.u32 %s231, 1
          %s587 = smul.addr %s586, 8
          %s588 = scalar_lea.vmem [#allocation10], %s587
          %590 = dma.done %s585, 128
        $region84: #{tpu_custom_call.1} parent=79 // pred_fallthru
          _
      $region80: #{tpu_custom_call.1} parent=5 // pred_fallthru
        _
    $region6: #{tpu_custom_call.1} parent=1 // loop_footer
      %s27 = sadd.s32 1, %s23
    $region7: #{tpu_custom_call.1} parent=1 // loop_footer_branch
      %22 = sbr.rel target = $region3
    $region8: #{tpu_custom_call.1} parent=1 // loop_exit
      _
    %591 = vsyncpa [#allocation3], 1
    %s592 = scalar_lea.sflag [#allocation3], 1
    %593 = vsyncpa %s592, 1
    %594 = vsyncpa [#allocation6], 1
    %595 = vsyncpa [#allocation9], 1
    %596 = vsyncpa [#allocation4], 1
    %s597 = scalar_lea.sflag [#allocation4], 1
    %598 = vsyncpa %s597, 1

</llo_original>
